<compile_context>
chip_gen: v5e
topology: v5e:2x2
jax: 0.10.0
libtpu: 0.0.40
codegen_flags: <defaults>
</compile_context>

<pallas_src>
import functools

import jax
import jax.numpy as jnp
from jax.experimental import pallas as pl
from jax.experimental.pallas import tpu as pltpu

BN_EPS = 1e-5
HIGH = jax.lax.Precision.HIGHEST


# ----------------------------------------------------------------------------
# Fused Pallas kernel: whole BaselineModel forward for one batch tile
# ----------------------------------------------------------------------------
def _fused_forward_kernel(ximg_ref, xtxt_ref,
                          w1_ref, b1_ref,
                          w2_ref, b2_ref,
                          w3_ref, b3_ref,
                          o_ref, xcat_ref, *, d_img):
    d_in = xcat_ref.shape[1]

    # Merge the two encoder streams into adjacent lanes of one operand so
    # layer 1 is a single MXU matmul: concat(left, right) @ W1.
    xcat_ref[:, 0:d_img] = ximg_ref[...]
    xcat_ref[:, d_img:d_in] = xtxt_ref[...]
    x = xcat_ref[...].astype(jnp.bfloat16)

    # linear_1 (bn_0 / frozen encoders / bn_1 folded in) + act_1
    h = jnp.dot(x, w1_ref[...], preferred_element_type=jnp.float32)
    h = jnp.maximum(h + b1_ref[...], 0.0)
    # linear_2 (bn_2 folded in) + act_2
    h = jnp.dot(h.astype(jnp.bfloat16), w2_ref[...],
                preferred_element_type=jnp.float32)
    h = jnp.maximum(h + b2_ref[...], 0.0)                       # (tb, 128) f32

    # logits + sigmoid on a lane-major (1, tb) row: transpose the final hidden
    # on the XLU, contract with the zero-padded (8, 128) logit weight on the
    # MXU (row 0 is the real weight), then sigmoid only tb elements.
    ht = jnp.transpose(h).astype(jnp.bfloat16)                  # (128, tb)
    lg = jnp.dot(w3_ref[...], ht, preferred_element_type=jnp.float32)  # (8, tb)
    row = lg[0:1, :] + b3_ref[...]                              # (1, tb)
    o_ref[...] = jax.nn.sigmoid(row).reshape(o_ref.shape)       # probability


# ----------------------------------------------------------------------------
# Wrapper: single pallas_call, batch-gridded, weights VMEM-resident
# ----------------------------------------------------------------------------
def _round_up(a, m):
    return ((a + m - 1) // m) * m


@functools.partial(jax.jit, static_argnames=("batch_tile",))
def baseline_model_forward(x_image, x_text, fparams, *, batch_tile=1024):
    B, d_img = x_image.shape
    _, d_txt = x_text.shape
    d_in = d_img + d_txt

    # Batch tile: multiple of 128 (lane-dense transposed output row), large
    # enough to amortize the ~0.35us/step grid overhead.
    batch_tile = max(128, (batch_tile // 128) * 128)
    tb = min(batch_tile, _round_up(B, 128))
    # Prefer >= 2 grid steps when the batch allows it (v7x has 2 TensorCores).
    if pl.cdiv(B, tb) < 2 and tb > 128:
        tb = _round_up(pl.cdiv(tb, 2), 128)
    Bp = pl.cdiv(B, tb) * tb
    if Bp != B:
        pad = Bp - B
        x_image = jnp.pad(x_image, ((0, pad), (0, 0)))
        x_text = jnp.pad(x_text, ((0, pad), (0, 0)))
    grid = Bp // tb

    w1, b1 = fparams["w1"], fparams["b1"]
    w2, b2 = fparams["w2"], fparams["b2"]
    w3, b3 = fparams["w3"], fparams["b3"]
    n_h1, n_h2 = w1.shape[1], w2.shape[1]

    def batch_spec(width):
        return pl.BlockSpec((tb, width), lambda i: (i, 0))

    def weight_spec(a):                        # stays VMEM-resident across grid
        return pl.BlockSpec(a.shape, lambda i: (0,) * a.ndim)

    flops = 2 * Bp * (d_in * n_h1 + n_h1 * n_h2 + n_h2 * 8)
    bytes_accessed = (4 * Bp * d_in                          # f32 inputs
                      + 2 * (w1.size + w2.size + w3.size)    # bf16 weights
                      + 4 * (b1.size + b2.size + b3.size)    # f32 biases
                      + 4 * Bp)                              # 1-wide f32 output

    out = pl.pallas_call(
        functools.partial(_fused_forward_kernel, d_img=d_img),
        out_shape=jax.ShapeDtypeStruct((grid, 1, tb), jnp.float32),
        grid_spec=pltpu.PrefetchScalarGridSpec(
            num_scalar_prefetch=0,
            grid=(grid,),
            in_specs=[
                batch_spec(d_img), batch_spec(d_txt),
                weight_spec(w1), weight_spec(b1),
                weight_spec(w2), weight_spec(b2),
                weight_spec(w3), weight_spec(b3),
            ],
            out_specs=pl.BlockSpec((1, 1, tb), lambda i: (i, 0, 0)),
            scratch_shapes=[pltpu.VMEM((tb, d_in), jnp.float32)],
        ),
        compiler_params=pltpu.CompilerParams(
            dimension_semantics=("parallel",)),
        cost_estimate=pl.CostEstimate(
            flops=flops,
            transcendentals=Bp,
            bytes_accessed=bytes_accessed),
    )(x_image, x_text, w1, b1, w2, b2, w3, b3)

    # (grid, 1, tb) lane-major rows -> (B, 1) probabilities
    return out.reshape(Bp, 1)[:B]


# ----------------------------------------------------------------------------
# Parameters: synthetic frozen encoders + head, then offline folding
# ----------------------------------------------------------------------------
def _fold_bn(gamma, beta, mean, var, eps=BN_EPS):
    scale = gamma / jnp.sqrt(var + eps)
    shift = beta - mean * scale
    return scale, shift


def make_raw_params(key, image_dim, text_dim, left_size, right_size):
    ks = jax.random.split(key, 24)
    u = lambda k, shape, s=0.1: jax.random.uniform(k, shape, jnp.float32, -s, s)
    p = {}
    # frozen "encoders" (stand-ins for image_net / text_net)
    p["img_w"] = u(ks[0], (image_dim, left_size))
    p["img_b"] = u(ks[1], (left_size,))
    p["txt_w"] = u(ks[2], (text_dim, right_size))
    p["txt_b"] = u(ks[3], (right_size,))
    input_size = left_size + right_size
    # bn_0 / linear_1 / bn_1 / linear_2 / bn_2 / logits
    p["bn0"] = (1.0 + u(ks[4], (input_size,)), u(ks[5], (input_size,)),
                u(ks[6], (input_size,)), 1.0 + jnp.abs(u(ks[7], (input_size,))))
    p["w1"] = u(ks[8], (input_size, 256))
    p["b1"] = u(ks[9], (256,))
    p["bn1"] = (1.0 + u(ks[10], (256,)), u(ks[11], (256,)),
                u(ks[12], (256,)), 1.0 + jnp.abs(u(ks[13], (256,))))
    p["w2"] = u(ks[14], (256, 128))
    p["b2"] = u(ks[15], (128,))
    p["bn2"] = (1.0 + u(ks[16], (128,)), u(ks[17], (128,)),
                u(ks[18], (128,)), 1.0 + jnp.abs(u(ks[19], (128,))))
    p["w3"] = u(ks[20], (128, 1))
    p["b3"] = u(ks[21], (1,))
    return p


def fold_params(raw, left_size):
    """Fold inference-mode BN0/BN1/BN2 and the frozen encoders into the
    adjacent Linear weights (exact with frozen running statistics); store
    matmul weights as bf16, biases in f32."""
    s0, t0 = _fold_bn(*raw["bn0"])
    s1, t1 = _fold_bn(*raw["bn1"])
    s2, t2 = _fold_bn(*raw["bn2"])

    # bn_0 into linear_1 (row scaling + bias shift)
    w1 = raw["w1"] * s0[:, None]
    b1 = raw["b1"] + jnp.matmul(t0, raw["w1"], precision=HIGH)
    # split linear_1 across the concat boundary, fold encoders in
    w1l, w1r = w1[:left_size], w1[left_size:]
    wi = jnp.matmul(raw["img_w"], w1l, precision=HIGH)
    wt = jnp.matmul(raw["txt_w"], w1r, precision=HIGH)
    b1 = (b1 + jnp.matmul(raw["img_b"], w1l, precision=HIGH)
              + jnp.matmul(raw["txt_b"], w1r, precision=HIGH))
    # bn_1 on the output side (column scaling); stack the two halves so the
    # kernel's single concatenated input hits one weight.
    w1s = jnp.concatenate([wi, wt], axis=0) * s1[None, :]
    b1 = b1 * s1 + t1
    # linear_2 with bn_2 folded in
    w2 = raw["w2"] * s2[None, :]
    b2 = raw["b2"] * s2 + t2
    # logits weight as a zero-padded (8, 128) block (row 0 is real) for the
    # transposed final matmul; bias stays a (1, 1) f32 scalar.
    w3p = jnp.zeros((8, 128), jnp.float32).at[0].set(raw["w3"][:, 0])
    b3 = jnp.reshape(raw["b3"], (1, 1)).astype(jnp.float32)

    return {"w1": w1s.astype(jnp.bfloat16), "b1": b1[None, :].astype(jnp.float32),
            "w2": w2.astype(jnp.bfloat16), "b2": b2[None, :].astype(jnp.float32),
            "w3": w3p.astype(jnp.bfloat16), "b3": b3}


# ----------------------------------------------------------------------------
# Pure-JAX reference matching the PyTorch op order (for correctness check)
# ----------------------------------------------------------------------------
def reference_forward(x_image, x_text, raw):
    left = jnp.matmul(x_image, raw["img_w"], precision=HIGH) + raw["img_b"]
    right = jnp.matmul(x_text, raw["txt_w"], precision=HIGH) + raw["txt_b"]
    # TODO(synk): PyTorch casts text_enc to FloatTensor; already f32 here.
    x = jnp.concatenate([left, right], axis=1)

    def bn(v, p):
        g, b, m, var = p
        return (v - m) / jnp.sqrt(var + BN_EPS) * g + b

    h = bn(x, raw["bn0"])
    h = jnp.maximum(bn(jnp.matmul(h, raw["w1"], precision=HIGH) + raw["b1"],
                       raw["bn1"]), 0.0)
    h = jnp.maximum(bn(jnp.matmul(h, raw["w2"], precision=HIGH) + raw["b2"],
                       raw["bn2"]), 0.0)
    return jax.nn.sigmoid(jnp.matmul(h, raw["w3"], precision=HIGH) + raw["b3"])


# ----------------------------------------------------------------------------
if __name__ == "__main__":
    key = jax.random.PRNGKey(0)
    k_param, k_img, k_txt = jax.random.split(key, 3)

    batch = 8
    image_dim, text_dim = 48, 24       # raw encoder input widths (synthetic)
    left_size, right_size = 32, 32     # kwargs of BaselineHeadModel

    raw = make_raw_params(k_param, image_dim, text_dim, left_size, right_size)
    fparams = fold_params(raw, left_size)

    x_image = jax.random.normal(k_img, (batch, image_dim), jnp.float32)
    x_text = jax.random.normal(k_txt, (batch, text_dim), jnp.float32)

    out = baseline_model_forward(x_image, x_text, fparams)
    out = jax.block_until_ready(out)

    ref = reference_forward(x_image, x_text, raw)

    assert out.shape == (batch, 1)
    assert out.dtype == jnp.float32
    assert bool(jnp.all((out >= 0.0) & (out <= 1.0)))
    err = float(jnp.max(jnp.abs(out - ref)))
    assert err < 5e-3, err
    print("KERNEL_OK")
</pallas_src>

<mosaic_0001>
module attributes {stable_mosaic.version = 11 : i64} {
  func.func @_fused_forward_kernel(%arg0: i32, %arg1: memref<128x48xf32, #tpu.memory_space<vmem>>, %arg2: memref<128x24xf32, #tpu.memory_space<vmem>>, %arg3: memref<72x256xbf16, #tpu.memory_space<vmem>>, %arg4: memref<1x256xf32, #tpu.memory_space<vmem>>, %arg5: memref<256x128xbf16, #tpu.memory_space<vmem>>, %arg6: memref<1x128xf32, #tpu.memory_space<vmem>>, %arg7: memref<8x128xbf16, #tpu.memory_space<vmem>>, %arg8: memref<1x1xf32, #tpu.memory_space<vmem>>, %arg9: memref<1x1x128xf32, #tpu.memory_space<vmem>>, %arg10: memref<128x72xf32, #tpu.memory_space<vmem>>) attributes {dimension_semantics = [#tpu.dimension_semantics<parallel>], iteration_bounds = array<i64: 1>, scalar_prefetch = 0 : i64, scratch_operands = 1 : i64, tpu.core_type = #tpu.core_type<tc>, window_params = [{transform_indices = @transform_0, window_bounds = array<i64: 128, 48>}, {transform_indices = @transform_1, window_bounds = array<i64: 128, 24>}, {pipeline_mode = #tpu.pipeline_mode<synchronous>, transform_indices = @transform_2, window_bounds = array<i64: 72, 256>}, {pipeline_mode = #tpu.pipeline_mode<synchronous>, transform_indices = @transform_3, window_bounds = array<i64: 1, 256>}, {pipeline_mode = #tpu.pipeline_mode<synchronous>, transform_indices = @transform_4, window_bounds = array<i64: 256, 128>}, {pipeline_mode = #tpu.pipeline_mode<synchronous>, transform_indices = @transform_5, window_bounds = array<i64: 1, 128>}, {pipeline_mode = #tpu.pipeline_mode<synchronous>, transform_indices = @transform_6, window_bounds = array<i64: 8, 128>}, {pipeline_mode = #tpu.pipeline_mode<synchronous>, transform_indices = @transform_7, window_bounds = array<i64: 1, 1>}, {transform_indices = @transform_8, window_bounds = array<i64: 1, 1, 128>}]} {
    %c0 = arith.constant 0 : index
    %c0_0 = arith.constant 0 : index
    %0 = vector.load %arg1[%c0, %c0_0] : memref<128x48xf32, #tpu.memory_space<vmem>>, vector<128x48xf32>
    %c0_1 = arith.constant 0 : index
    %c0_2 = arith.constant 0 : index
    %1 = vector.load %arg10[%c0_1, %c0_2] : memref<128x72xf32, #tpu.memory_space<vmem>>, vector<128x48xf32>
    tpu.vector_store %arg10[%c0_1, %c0_2], %0 {strides = array<i32>} : memref<128x72xf32, #tpu.memory_space<vmem>>, vector<128x48xf32>,
    %c0_3 = arith.constant 0 : index
    %c0_4 = arith.constant 0 : index
    %2 = vector.load %arg2[%c0_3, %c0_4] : memref<128x24xf32, #tpu.memory_space<vmem>>, vector<128x24xf32>
    %c0_5 = arith.constant 0 : index
    %c48 = arith.constant 48 : index
    %3 = vector.load %arg10[%c0_5, %c48] : memref<128x72xf32, #tpu.memory_space<vmem>>, vector<128x24xf32>
    tpu.vector_store %arg10[%c0_5, %c48], %2 {strides = array<i32>} : memref<128x72xf32, #tpu.memory_space<vmem>>, vector<128x24xf32>,
    %c0_6 = arith.constant 0 : index
    %c0_7 = arith.constant 0 : index
    %4 = vector.load %arg10[%c0_6, %c0_7] : memref<128x72xf32, #tpu.memory_space<vmem>>, vector<128x72xf32>
    %5 = arith.truncf %4 : vector<128x72xf32> to vector<128x72xbf16>
    %c0_8 = arith.constant 0 : index
    %c0_9 = arith.constant 0 : index
    %6 = vector.load %arg3[%c0_8, %c0_9] : memref<72x256xbf16, #tpu.memory_space<vmem>>, vector<72x256xbf16>
    %cst = arith.constant dense<0.000000e+00> : vector<128x256xf32>
    %7 = tpu.matmul %5, %6, %cst {dimension_numbers = #tpu.dot_dimension_numbers<[1], [0], [0], [1], [0, 0, 1, 1], [], []>} : vector<128x72xbf16>, vector<72x256xbf16>, vector<128x256xf32> -> vector<128x256xf32>
    %c0_10 = arith.constant 0 : index
    %c0_11 = arith.constant 0 : index
    %8 = vector.load %arg4[%c0_10, %c0_11] : memref<1x256xf32, #tpu.memory_space<vmem>>, vector<1x256xf32>
    %9 = vector.broadcast %8 : vector<1x256xf32> to vector<128x256xf32>
    %10 = arith.addf %7, %9 : vector<128x256xf32>
    %cst_12 = arith.constant 0.000000e+00 : f32
    %11 = vector.broadcast %cst_12 : f32 to vector<128x256xf32>
    %12 = arith.maximumf %10, %11 : vector<128x256xf32>
    %13 = arith.truncf %12 : vector<128x256xf32> to vector<128x256xbf16>
    %c0_13 = arith.constant 0 : index
    %c0_14 = arith.constant 0 : index
    %14 = vector.load %arg5[%c0_13, %c0_14] : memref<256x128xbf16, #tpu.memory_space<vmem>>, vector<256x128xbf16>
    %cst_15 = arith.constant dense<0.000000e+00> : vector<128x128xf32>
    %15 = tpu.matmul %13, %14, %cst_15 {dimension_numbers = #tpu.dot_dimension_numbers<[1], [0], [0], [1], [0, 0, 1, 1], [], []>} : vector<128x256xbf16>, vector<256x128xbf16>, vector<128x128xf32> -> vector<128x128xf32>
    %c0_16 = arith.constant 0 : index
    %c0_17 = arith.constant 0 : index
    %16 = vector.load %arg6[%c0_16, %c0_17] : memref<1x128xf32, #tpu.memory_space<vmem>>, vector<1x128xf32>
    %17 = vector.broadcast %16 : vector<1x128xf32> to vector<128x128xf32>
    %18 = arith.addf %15, %17 : vector<128x128xf32>
    %cst_18 = arith.constant 0.000000e+00 : f32
    %19 = vector.broadcast %cst_18 : f32 to vector<128x128xf32>
    %20 = arith.maximumf %18, %19 : vector<128x128xf32>
    %21 = tpu.transpose %20, [1, 0] : vector<128x128xf32> -> vector<128x128xf32>
    %22 = arith.truncf %21 : vector<128x128xf32> to vector<128x128xbf16>
    %c0_19 = arith.constant 0 : index
    %c0_20 = arith.constant 0 : index
    %23 = vector.load %arg7[%c0_19, %c0_20] : memref<8x128xbf16, #tpu.memory_space<vmem>>, vector<8x128xbf16>
    %cst_21 = arith.constant dense<0.000000e+00> : vector<8x128xf32>
    %24 = tpu.matmul %23, %22, %cst_21 {dimension_numbers = #tpu.dot_dimension_numbers<[1], [0], [0], [1], [0, 0, 1, 1], [], []>} : vector<8x128xbf16>, vector<128x128xbf16>, vector<8x128xf32> -> vector<8x128xf32>
    %25 = vector.extract_strided_slice %24 {offsets = [0, 0], sizes = [1, 128], strides = [1, 1]} : vector<8x128xf32> to vector<1x128xf32>
    %c0_22 = arith.constant 0 : index
    %c0_23 = arith.constant 0 : index
    %26 = vector.load %arg8[%c0_22, %c0_23] : memref<1x1xf32, #tpu.memory_space<vmem>>, vector<1x1xf32>
    %27 = vector.broadcast %26 : vector<1x1xf32> to vector<1x128xf32>
    %28 = arith.addf %25, %27 : vector<1x128xf32>
    %29 = arith.negf %28 : vector<1x128xf32>
    %30 = math.exp %29 : vector<1x128xf32>
    %cst_24 = arith.constant 1.000000e+00 : f32
    %31 = vector.broadcast %cst_24 : f32 to vector<1x128xf32>
    %32 = arith.addf %31, %30 : vector<1x128xf32>
    %33 = arith.divf %31, %32 : vector<1x128xf32>
    %34 = vector.shape_cast %33 : vector<1x128xf32> to vector<1x1x128xf32>
    %c0_25 = arith.constant 0 : index
    %c0_26 = arith.constant 0 : index
    %c0_27 = arith.constant 0 : index
    %35 = vector.load %arg9[%c0_25, %c0_26, %c0_27] : memref<1x1x128xf32, #tpu.memory_space<vmem>>, vector<1x1x128xf32>
    tpu.vector_store %arg9[%c0_25, %c0_26, %c0_27], %34 {strides = array<i32>} : memref<1x1x128xf32, #tpu.memory_space<vmem>>, vector<1x1x128xf32>,
    return
  }
  func.func @transform_0(%arg0: i32) -> (i32, i32) {
    %c0_i32 = arith.constant 0 : i32
    %c0_i32_0 = arith.constant 0 : i32
    return %arg0, %c0_i32 : i32, i32
  }
  func.func @transform_1(%arg0: i32) -> (i32, i32) {
    %c0_i32 = arith.constant 0 : i32
    %c0_i32_0 = arith.constant 0 : i32
    return %arg0, %c0_i32 : i32, i32
  }
  func.func @transform_2(%arg0: i32) -> (i32, i32) {
    %c0_i32 = arith.constant 0 : i32
    %c0_i32_0 = arith.constant 0 : i32
    %c0_i32_1 = arith.constant 0 : i32
    return %c0_i32, %c0_i32_0 : i32, i32
  }
  func.func @transform_3(%arg0: i32) -> (i32, i32) {
    %c0_i32 = arith.constant 0 : i32
    %c0_i32_0 = arith.constant 0 : i32
    %c0_i32_1 = arith.constant 0 : i32
    return %c0_i32, %c0_i32_0 : i32, i32
  }
  func.func @transform_4(%arg0: i32) -> (i32, i32) {
    %c0_i32 = arith.constant 0 : i32
    %c0_i32_0 = arith.constant 0 : i32
    %c0_i32_1 = arith.constant 0 : i32
    return %c0_i32, %c0_i32_0 : i32, i32
  }
  func.func @transform_5(%arg0: i32) -> (i32, i32) {
    %c0_i32 = arith.constant 0 : i32
    %c0_i32_0 = arith.constant 0 : i32
    %c0_i32_1 = arith.constant 0 : i32
    return %c0_i32, %c0_i32_0 : i32, i32
  }
  func.func @transform_6(%arg0: i32) -> (i32, i32) {
    %c0_i32 = arith.constant 0 : i32
    %c0_i32_0 = arith.constant 0 : i32
    %c0_i32_1 = arith.constant 0 : i32
    return %c0_i32, %c0_i32_0 : i32, i32
  }
  func.func @transform_7(%arg0: i32) -> (i32, i32) {
    %c0_i32 = arith.constant 0 : i32
    %c0_i32_0 = arith.constant 0 : i32
    %c0_i32_1 = arith.constant 0 : i32
    return %c0_i32, %c0_i32_0 : i32, i32
  }
  func.func @transform_8(%arg0: i32) -> (i32, i32, i32) {
    %c0_i32 = arith.constant 0 : i32
    %c0_i32_0 = arith.constant 0 : i32
    %c0_i32_1 = arith.constant 0 : i32
    return %arg0, %c0_i32, %c0_i32_0 : i32, i32, i32
  }
}

</mosaic_0001>

<llo_original>
// kernel: baseline_model_forward.1
$region0: #{baseline_model_forward.1}
  #allocation0 [shape = 'u32[]', space=smem, size = 0x4, offset = 0x4, fixed_abs, tag = 'smem constant byte address 0x4 - core index']
  #allocation1 [shape = 'u32[72,128]{1,0:T(1,128)}', space=vmem, size = 0x9000, scoped, tag = 'internal scratch']
  #allocation2 [shape = 'f32[128,72]{1,0:T(8,128)}', space=vmem, size = 0x10000, scoped, tag = 'scratch operand']
  #allocation3 [shape = 'f32[1,1]{1,0:T(1,128)S(1)}', space=vmem, size = 0x200, scoped, tag = 'scoped memory for baseline_model_forward.1']
  %s0 = inlined_call_operand.vmem [shape: f32[128,48], index: 0, kind: input, shape index: {}]
  %s1 = inlined_call_operand.vmem [shape: f32[128,24], index: 1, kind: input, shape index: {}]
  %s2 = inlined_call_operand.vmem [shape: bf16[72,256], index: 2, kind: input, shape index: {}]
  %s3 = inlined_call_operand.vmem [shape: f32[1,256], index: 3, kind: input, shape index: {}]
  %s4 = inlined_call_operand.vmem [shape: bf16[256,128], index: 4, kind: input, shape index: {}]
  %s5 = inlined_call_operand.vmem [shape: f32[1,128], index: 5, kind: input, shape index: {}]
  %s6 = inlined_call_operand.vmem [shape: bf16[8,128], index: 6, kind: input, shape index: {}]
  %s7 = inlined_call_operand.<no memory space> [shape: f32[1,1], index: 7, kind: input, shape index: {}]
  %s8 = inlined_call_operand.vmem [shape: f32[1,1,128], index: 8, kind: output, shape index: {}]
  %s9 = sld [smem:[#allocation0]]
  $region42: #{baseline_model_forward.1} parent=0
    _
  %s11 = ssub.s32 1, %s9
  %s12 = scalar_select 0, %s11, %s9
  %v13 = vstv %s7
  %14 = vst [vmem:[#allocation3] sm:$0x1] %v13
  // Predicated region
  $region2: #{baseline_model_forward.1} parent=0 // pred_check
    _
  $region3: #{baseline_model_forward.1} parent=0 // pred_check_branch
    %16 = sbr.rel (0) target = $region5
  $region4: #{baseline_model_forward.1} parent=0 // pred_region
    _
  $region5: #{baseline_model_forward.1} parent=0 // pred_fallthru
    _
  // Predicated region
  $region6: #{baseline_model_forward.1} parent=0 // pred_check
    _
  $region7: #{baseline_model_forward.1} parent=0 // pred_check_branch
    %18 = sbr.rel (0) target = $region9
  $region8: #{baseline_model_forward.1} parent=0 // pred_region
    _
  $region9: #{baseline_model_forward.1} parent=0 // pred_fallthru
    _
  // Predicated region
  $region10: #{baseline_model_forward.1} parent=0 // pred_check
    _
  $region11: #{baseline_model_forward.1} parent=0 // pred_check_branch
    %20 = sbr.rel (0) target = $region13
  $region12: #{baseline_model_forward.1} parent=0 // pred_region
    _
  $region13: #{baseline_model_forward.1} parent=0 // pred_fallthru
    _
  // Predicated region
  $region14: #{baseline_model_forward.1} parent=0 // pred_check
    _
  $region15: #{baseline_model_forward.1} parent=0 // pred_check_branch
    %22 = sbr.rel (0) target = $region17
  $region16: #{baseline_model_forward.1} parent=0 // pred_region
    _
  $region17: #{baseline_model_forward.1} parent=0 // pred_fallthru
    _
  // Predicated region
  $region18: #{baseline_model_forward.1} parent=0 // pred_check
    _
  $region19: #{baseline_model_forward.1} parent=0 // pred_check_branch
    %24 = sbr.rel (0) target = $region21
  $region20: #{baseline_model_forward.1} parent=0 // pred_region
    _
  $region21: #{baseline_model_forward.1} parent=0 // pred_fallthru
    _
  // Predicated region
  $region22: #{baseline_model_forward.1} parent=0 // pred_check
    _
  $region23: #{baseline_model_forward.1} parent=0 // pred_check_branch
    %26 = sbr.rel (0) target = $region25
  $region24: #{baseline_model_forward.1} parent=0 // pred_region
    _
  $region25: #{baseline_model_forward.1} parent=0 // pred_fallthru
    _
  // Predicated region
  $region26: #{baseline_model_forward.1} parent=0 // pred_check
    _
  $region27: #{baseline_model_forward.1} parent=0 // pred_check_branch
    %28 = sbr.rel (0) target = $region29
  $region28: #{baseline_model_forward.1} parent=0 // pred_region
    _
  $region29: #{baseline_model_forward.1} parent=0 // pred_fallthru
    _
  // Predicated region
  $region30: #{baseline_model_forward.1} parent=0 // pred_check
    _
  $region31: #{baseline_model_forward.1} parent=0 // pred_check_branch
    %30 = sbr.rel (0) target = $region33
  $region32: #{baseline_model_forward.1} parent=0 // pred_region
    _
  $region33: #{baseline_model_forward.1} parent=0 // pred_fallthru
    _
  %v32 = vld [vmem:[%s0] sm:$0xff]
  %v33 = vld [vmem:[%s0 + $0x8] sm:$0xff]
  %v34 = vld [vmem:[%s0 + $0x10] sm:$0xff]
  %v35 = vld [vmem:[%s0 + $0x18] sm:$0xff]
  %v36 = vld [vmem:[%s0 + $0x20] sm:$0xff]
  %v37 = vld [vmem:[%s0 + $0x28] sm:$0xff]
  %v38 = vld [vmem:[%s0 + $0x30] sm:$0xff]
  %v39 = vld [vmem:[%s0 + $0x38] sm:$0xff]
  %v40 = vld [vmem:[%s0 + $0x40] sm:$0xff]
  %v41 = vld [vmem:[%s0 + $0x48] sm:$0xff]
  %v42 = vld [vmem:[%s0 + $0x50] sm:$0xff]
  %v43 = vld [vmem:[%s0 + $0x58] sm:$0xff]
  %v44 = vld [vmem:[%s0 + $0x60] sm:$0xff]
  %v45 = vld [vmem:[%s0 + $0x68] sm:$0xff]
  %v46 = vld [vmem:[%s0 + $0x70] sm:$0xff]
  %v47 = vld [vmem:[%s0 + $0x78] sm:$0xff]
  %vm48 = vcmask 392192
  %49 = vst.msk [vmem:[#allocation2] sm:$0xff] %vm48, %v32
  %50 = vst.msk [vmem:[#allocation2 + $0x8] sm:$0xff] %vm48, %v33
  %51 = vst.msk [vmem:[#allocation2 + $0x10] sm:$0xff] %vm48, %v34
  %52 = vst.msk [vmem:[#allocation2 + $0x18] sm:$0xff] %vm48, %v35
  %53 = vst.msk [vmem:[#allocation2 + $0x20] sm:$0xff] %vm48, %v36
  %54 = vst.msk [vmem:[#allocation2 + $0x28] sm:$0xff] %vm48, %v37
  %55 = vst.msk [vmem:[#allocation2 + $0x30] sm:$0xff] %vm48, %v38
  %56 = vst.msk [vmem:[#allocation2 + $0x38] sm:$0xff] %vm48, %v39
  %57 = vst.msk [vmem:[#allocation2 + $0x40] sm:$0xff] %vm48, %v40
  %58 = vst.msk [vmem:[#allocation2 + $0x48] sm:$0xff] %vm48, %v41
  %59 = vst.msk [vmem:[#allocation2 + $0x50] sm:$0xff] %vm48, %v42
  %60 = vst.msk [vmem:[#allocation2 + $0x58] sm:$0xff] %vm48, %v43
  %61 = vst.msk [vmem:[#allocation2 + $0x60] sm:$0xff] %vm48, %v44
  %62 = vst.msk [vmem:[#allocation2 + $0x68] sm:$0xff] %vm48, %v45
  %63 = vst.msk [vmem:[#allocation2 + $0x70] sm:$0xff] %vm48, %v46
  %64 = vst.msk [vmem:[#allocation2 + $0x78] sm:$0xff] %vm48, %v47
  %v65 = vld [vmem:[%s1] sm:$0xff]
  %v66 = vld [vmem:[%s1 + $0x8] sm:$0xff]
  %v67 = vld [vmem:[%s1 + $0x10] sm:$0xff]
  %v68 = vld [vmem:[%s1 + $0x18] sm:$0xff]
  %v69 = vld [vmem:[%s1 + $0x20] sm:$0xff]
  %v70 = vld [vmem:[%s1 + $0x28] sm:$0xff]
  %v71 = vld [vmem:[%s1 + $0x30] sm:$0xff]
  %v72 = vld [vmem:[%s1 + $0x38] sm:$0xff]
  %v73 = vld [vmem:[%s1 + $0x40] sm:$0xff]
  %v74 = vld [vmem:[%s1 + $0x48] sm:$0xff]
  %v75 = vld [vmem:[%s1 + $0x50] sm:$0xff]
  %v76 = vld [vmem:[%s1 + $0x58] sm:$0xff]
  %v77 = vld [vmem:[%s1 + $0x60] sm:$0xff]
  %v78 = vld [vmem:[%s1 + $0x68] sm:$0xff]
  %v79 = vld [vmem:[%s1 + $0x70] sm:$0xff]
  %v80 = vld [vmem:[%s1 + $0x78] sm:$0xff]
  %97 = vrot.lane.b32.xlu0 %v65, 48
  %v98 = vpop.permute.xlu0 %97
  %99 = vrot.lane.b32.xlu0 %v66, 48
  %v100 = vpop.permute.xlu0 %99
  %101 = vrot.lane.b32.xlu0 %v67, 48
  %v102 = vpop.permute.xlu0 %101
  %103 = vrot.lane.b32.xlu0 %v68, 48
  %v104 = vpop.permute.xlu0 %103
  %105 = vrot.lane.b32.xlu0 %v69, 48
  %v106 = vpop.permute.xlu0 %105
  %107 = vrot.lane.b32.xlu0 %v70, 48
  %v108 = vpop.permute.xlu0 %107
  %109 = vrot.lane.b32.xlu0 %v71, 48
  %v110 = vpop.permute.xlu0 %109
  %111 = vrot.lane.b32.xlu0 %v72, 48
  %v112 = vpop.permute.xlu0 %111
  %113 = vrot.lane.b32.xlu0 %v73, 48
  %v114 = vpop.permute.xlu0 %113
  %115 = vrot.lane.b32.xlu0 %v74, 48
  %v116 = vpop.permute.xlu0 %115
  %117 = vrot.lane.b32.xlu0 %v75, 48
  %v118 = vpop.permute.xlu0 %117
  %119 = vrot.lane.b32.xlu0 %v76, 48
  %v120 = vpop.permute.xlu0 %119
  %121 = vrot.lane.b32.xlu0 %v77, 48
  %v122 = vpop.permute.xlu0 %121
  %123 = vrot.lane.b32.xlu0 %v78, 48
  %v124 = vpop.permute.xlu0 %123
  %125 = vrot.lane.b32.xlu0 %v79, 48
  %v126 = vpop.permute.xlu0 %125
  %127 = vrot.lane.b32.xlu0 %v80, 48
  %v128 = vpop.permute.xlu0 %127
  %vm145 = vcmask 589184
  %146 = vst.msk [vmem:[#allocation2] sm:$0xff] %vm145, %v98
  %147 = vst.msk [vmem:[#allocation2 + $0x8] sm:$0xff] %vm145, %v100
  %148 = vst.msk [vmem:[#allocation2 + $0x10] sm:$0xff] %vm145, %v102
  %149 = vst.msk [vmem:[#allocation2 + $0x18] sm:$0xff] %vm145, %v104
  %150 = vst.msk [vmem:[#allocation2 + $0x20] sm:$0xff] %vm145, %v106
  %151 = vst.msk [vmem:[#allocation2 + $0x28] sm:$0xff] %vm145, %v108
  %152 = vst.msk [vmem:[#allocation2 + $0x30] sm:$0xff] %vm145, %v110
  %153 = vst.msk [vmem:[#allocation2 + $0x38] sm:$0xff] %vm145, %v112
  %154 = vst.msk [vmem:[#allocation2 + $0x40] sm:$0xff] %vm145, %v114
  %155 = vst.msk [vmem:[#allocation2 + $0x48] sm:$0xff] %vm145, %v116
  %156 = vst.msk [vmem:[#allocation2 + $0x50] sm:$0xff] %vm145, %v118
  %157 = vst.msk [vmem:[#allocation2 + $0x58] sm:$0xff] %vm145, %v120
  %158 = vst.msk [vmem:[#allocation2 + $0x60] sm:$0xff] %vm145, %v122
  %159 = vst.msk [vmem:[#allocation2 + $0x68] sm:$0xff] %vm145, %v124
  %160 = vst.msk [vmem:[#allocation2 + $0x70] sm:$0xff] %vm145, %v126
  %161 = vst.msk [vmem:[#allocation2 + $0x78] sm:$0xff] %vm145, %v128
  %v162 = vld [vmem:[#allocation2] sm:$0xff]
  %v163 = vld [vmem:[#allocation2 + $0x8] sm:$0xff]
  %v164 = vld [vmem:[#allocation2 + $0x10] sm:$0xff]
  %v165 = vld [vmem:[#allocation2 + $0x18] sm:$0xff]
  %v166 = vld [vmem:[#allocation2 + $0x20] sm:$0xff]
  %v167 = vld [vmem:[#allocation2 + $0x28] sm:$0xff]
  %v168 = vld [vmem:[#allocation2 + $0x30] sm:$0xff]
  %v169 = vld [vmem:[#allocation2 + $0x38] sm:$0xff]
  %v170 = vld [vmem:[#allocation2 + $0x40] sm:$0xff]
  %v171 = vld [vmem:[#allocation2 + $0x48] sm:$0xff]
  %v172 = vld [vmem:[#allocation2 + $0x50] sm:$0xff]
  %v173 = vld [vmem:[#allocation2 + $0x58] sm:$0xff]
  %v174 = vld [vmem:[#allocation2 + $0x60] sm:$0xff]
  %v175 = vld [vmem:[#allocation2 + $0x68] sm:$0xff]
  %v176 = vld [vmem:[#allocation2 + $0x70] sm:$0xff]
  %v177 = vld [vmem:[#allocation2 + $0x78] sm:$0xff]
  %v178 = vpack.c.bf16 %v163, %v162
  %v179 = vpack.c.bf16 %v165, %v164
  %v180 = vpack.c.bf16 %v167, %v166
  %v181 = vpack.c.bf16 %v169, %v168
  %v182 = vpack.c.bf16 %v171, %v170
  %v183 = vpack.c.bf16 %v173, %v172
  %v184 = vpack.c.bf16 %v175, %v174
  %v185 = vpack.c.bf16 %v177, %v176
  %v186 = vld [vmem:[%s2] sm:$0xff]
  %v187 = vld [vmem:[%s2 + $0x8] sm:$0xff]
  %v188 = vld [vmem:[%s2 + $0x10] sm:$0xff]
  %v189 = vld [vmem:[%s2 + $0x18] sm:$0xff]
  %v190 = vld [vmem:[%s2 + $0x20] sm:$0xff]
  %v191 = vld [vmem:[%s2 + $0x28] sm:$0xff]
  %v192 = vld [vmem:[%s2 + $0x30] sm:$0xff]
  %v193 = vld [vmem:[%s2 + $0x38] sm:$0xff]
  %v194 = vld [vmem:[%s2 + $0x40] sm:$0xff]
  %v195 = vld [vmem:[%s3] sm:$0x3]
  %v197 = vperm.slane %v195, 0
  %v198 = vperm.slane %v195, 1
  %v210 = vunpack.c.l.b16 %v186
  %v211 = vunpack.c.h.b16 %v186
  %v212 = vunpack.c.l.b16 %v187
  %v213 = vunpack.c.h.b16 %v187
  %v214 = vunpack.c.l.b16 %v188
  %v215 = vunpack.c.h.b16 %v188
  %v216 = vunpack.c.l.b16 %v189
  %v217 = vunpack.c.h.b16 %v189
  %v218 = vunpack.c.l.b16 %v190
  %v219 = vunpack.c.h.b16 %v190
  %v220 = vunpack.c.l.b16 %v191
  %v221 = vunpack.c.h.b16 %v191
  %v222 = vunpack.c.l.b16 %v192
  %v223 = vunpack.c.h.b16 %v192
  %v224 = vunpack.c.l.b16 %v193
  %v225 = vunpack.c.h.b16 %v193
  %v226 = vunpack.c.l.b16 %v194
  %v227 = vunpack.c.h.b16 %v194
  %v228 = vpack.c.b16 %v212, %v210
  %v229 = vpack.c.b16 %v213, %v211
  %v230 = vpack.c.b16 %v216, %v214
  %v231 = vpack.c.b16 %v217, %v215
  %v232 = vpack.c.b16 %v220, %v218
  %v233 = vpack.c.b16 %v221, %v219
  %v234 = vpack.c.b16 %v224, %v222
  %v235 = vpack.c.b16 %v225, %v223
  %v236 = vpack.c.b16 %v226, %v226
  %v237 = vpack.c.b16 %v227, %v227
  %vm246 = vcmask 588800
  %v248 = vsel %vm246, %v178, 0
  %v251 = vsel %vm246, %v179, 0
  %v254 = vsel %vm246, %v180, 0
  %v257 = vsel %vm246, %v181, 0
  %v260 = vsel %vm246, %v182, 0
  %v263 = vsel %vm246, %v183, 0
  %v266 = vsel %vm246, %v184, 0
  %v269 = vsel %vm246, %v185, 0
  %vm271 = vcmask 1043456
  %v273 = vsel %vm271, %v236, 0
  %v276 = vsel %vm271, %v237, 0
  %278 = vmatpush.bf16.msra.mxu0 0
  %279 = vmatpush.bf16.msra.mxu0 0
  %280 = vmatpush.bf16.msra.mxu0 0
  %281 = vmatpush.bf16.msra.mxu0 %v273
  %282 = vmatpush.bf16.msra.mxu0 %v234
  %283 = vmatpush.bf16.msra.mxu0 %v232
  %284 = vmatpush.bf16.msra.mxu0 %v230
  %285 = vmatpush.bf16.msra.mxu0 %v228
  %286 = vmatmul.bf16.gmra.mxu0 %v248
  %v287 = vpop.f32.mrf.mxu0
  %v288 = vadd.f32 %v197, %v287
  %v289 = vpop.f32.mrf.mxu0
  %v290 = vadd.f32 %v197, %v289
  %291 = vmatmul.bf16.gmra.mxu0 %v251
  %v292 = vpop.f32.mrf.mxu0
  %v293 = vadd.f32 %v197, %v292
  %v294 = vpop.f32.mrf.mxu0
  %v295 = vadd.f32 %v197, %v294
  %296 = vmatmul.bf16.gmra.mxu0 %v254
  %v297 = vpop.f32.mrf.mxu0
  %v298 = vadd.f32 %v197, %v297
  %v299 = vpop.f32.mrf.mxu0
  %v300 = vadd.f32 %v197, %v299
  %301 = vmatmul.bf16.gmra.mxu0 %v257
  %v302 = vpop.f32.mrf.mxu0
  %v303 = vadd.f32 %v197, %v302
  %v304 = vpop.f32.mrf.mxu0
  %v305 = vadd.f32 %v197, %v304
  %306 = vmatmul.bf16.gmra.mxu0 %v260
  %v307 = vpop.f32.mrf.mxu0
  %v308 = vadd.f32 %v197, %v307
  %v309 = vpop.f32.mrf.mxu0
  %v310 = vadd.f32 %v197, %v309
  %311 = vmatmul.bf16.gmra.mxu0 %v263
  %v312 = vpop.f32.mrf.mxu0
  %v313 = vadd.f32 %v197, %v312
  %v314 = vpop.f32.mrf.mxu0
  %v315 = vadd.f32 %v197, %v314
  %316 = vmatmul.bf16.gmra.mxu0 %v266
  %v317 = vpop.f32.mrf.mxu0
  %v318 = vadd.f32 %v197, %v317
  %v319 = vpop.f32.mrf.mxu0
  %v320 = vadd.f32 %v197, %v319
  %321 = vmatmul.bf16.gmra.mxu0 %v269
  %v322 = vpop.f32.mrf.mxu0
  %v323 = vadd.f32 %v197, %v322
  %v324 = vpop.f32.mrf.mxu0
  %v325 = vadd.f32 %v197, %v324
  %326 = vdwg.mxu0
  %327 = vmatpush.bf16.msra.mxu0 0
  %328 = vmatpush.bf16.msra.mxu0 0
  %329 = vmatpush.bf16.msra.mxu0 0
  %330 = vmatpush.bf16.msra.mxu0 %v276
  %331 = vmatpush.bf16.msra.mxu0 %v235
  %332 = vmatpush.bf16.msra.mxu0 %v233
  %333 = vmatpush.bf16.msra.mxu0 %v231
  %334 = vmatpush.bf16.msra.mxu0 %v229
  %335 = vmatmul.bf16.gmra.mxu0 %v248
  %v336 = vpop.f32.mrf.mxu0
  %v337 = vadd.f32 %v198, %v336
  %v338 = vpop.f32.mrf.mxu0
  %v339 = vadd.f32 %v198, %v338
  %340 = vmatmul.bf16.gmra.mxu0 %v251
  %v341 = vpop.f32.mrf.mxu0
  %v342 = vadd.f32 %v198, %v341
  %v343 = vpop.f32.mrf.mxu0
  %v344 = vadd.f32 %v198, %v343
  %345 = vmatmul.bf16.gmra.mxu0 %v254
  %v346 = vpop.f32.mrf.mxu0
  %v347 = vadd.f32 %v198, %v346
  %v348 = vpop.f32.mrf.mxu0
  %v349 = vadd.f32 %v198, %v348
  %350 = vmatmul.bf16.gmra.mxu0 %v257
  %v351 = vpop.f32.mrf.mxu0
  %v352 = vadd.f32 %v198, %v351
  %v353 = vpop.f32.mrf.mxu0
  %v354 = vadd.f32 %v198, %v353
  %355 = vmatmul.bf16.gmra.mxu0 %v260
  %v356 = vpop.f32.mrf.mxu0
  %v357 = vadd.f32 %v198, %v356
  %v358 = vpop.f32.mrf.mxu0
  %v359 = vadd.f32 %v198, %v358
  %360 = vmatmul.bf16.gmra.mxu0 %v263
  %v361 = vpop.f32.mrf.mxu0
  %v362 = vadd.f32 %v198, %v361
  %v363 = vpop.f32.mrf.mxu0
  %v364 = vadd.f32 %v198, %v363
  %365 = vmatmul.bf16.gmra.mxu0 %v266
  %v366 = vpop.f32.mrf.mxu0
  %v367 = vadd.f32 %v198, %v366
  %v368 = vpop.f32.mrf.mxu0
  %v369 = vadd.f32 %v198, %v368
  %370 = vmatmul.bf16.gmra.mxu0 %v269
  %v371 = vpop.f32.mrf.mxu0
  %v372 = vadd.f32 %v198, %v371
  %v373 = vpop.f32.mrf.mxu0
  %v374 = vadd.f32 %v198, %v373
  %375 = vdwg.mxu0
  %v376 = vmax.f32 %v288, 0.0
  %v377 = vmax.f32 %v337, 0.0
  %v378 = vmax.f32 %v290, 0.0
  %v379 = vmax.f32 %v339, 0.0
  %v380 = vmax.f32 %v293, 0.0
  %v381 = vmax.f32 %v342, 0.0
  %v382 = vmax.f32 %v295, 0.0
  %v383 = vmax.f32 %v344, 0.0
  %v384 = vmax.f32 %v298, 0.0
  %v385 = vmax.f32 %v347, 0.0
  %v386 = vmax.f32 %v300, 0.0
  %v387 = vmax.f32 %v349, 0.0
  %v388 = vmax.f32 %v303, 0.0
  %v389 = vmax.f32 %v352, 0.0
  %v390 = vmax.f32 %v305, 0.0
  %v391 = vmax.f32 %v354, 0.0
  %v392 = vmax.f32 %v308, 0.0
  %v393 = vmax.f32 %v357, 0.0
  %v394 = vmax.f32 %v310, 0.0
  %v395 = vmax.f32 %v359, 0.0
  %v396 = vmax.f32 %v313, 0.0
  %v397 = vmax.f32 %v362, 0.0
  %v398 = vmax.f32 %v315, 0.0
  %v399 = vmax.f32 %v364, 0.0
  %v400 = vmax.f32 %v318, 0.0
  %v401 = vmax.f32 %v367, 0.0
  %v402 = vmax.f32 %v320, 0.0
  %v403 = vmax.f32 %v369, 0.0
  %v404 = vmax.f32 %v323, 0.0
  %v405 = vmax.f32 %v372, 0.0
  %v406 = vmax.f32 %v325, 0.0
  %v407 = vmax.f32 %v374, 0.0
  %v408 = vpack.c.bf16 %v378, %v376
  %v409 = vpack.c.bf16 %v379, %v377
  %v410 = vpack.c.bf16 %v382, %v380
  %v411 = vpack.c.bf16 %v383, %v381
  %v412 = vpack.c.bf16 %v386, %v384
  %v413 = vpack.c.bf16 %v387, %v385
  %v414 = vpack.c.bf16 %v390, %v388
  %v415 = vpack.c.bf16 %v391, %v389
  %v416 = vpack.c.bf16 %v394, %v392
  %v417 = vpack.c.bf16 %v395, %v393
  %v418 = vpack.c.bf16 %v398, %v396
  %v419 = vpack.c.bf16 %v399, %v397
  %v420 = vpack.c.bf16 %v402, %v400
  %v421 = vpack.c.bf16 %v403, %v401
  %v422 = vpack.c.bf16 %v406, %v404
  %v423 = vpack.c.bf16 %v407, %v405
  %v424 = vld [vmem:[%s4] sm:$0xf]
  %v425 = vld [vmem:[%s4 + $0x4] sm:$0xf]
  %v426 = vld [vmem:[%s4 + $0x8] sm:$0xf]
  %v427 = vld [vmem:[%s4 + $0xc] sm:$0xf]
  %v428 = vld [vmem:[%s4 + $0x10] sm:$0xf]
  %v429 = vld [vmem:[%s4 + $0x14] sm:$0xf]
  %v430 = vld [vmem:[%s4 + $0x18] sm:$0xf]
  %v431 = vld [vmem:[%s4 + $0x1c] sm:$0xf]
  %v432 = vld [vmem:[%s4 + $0x20] sm:$0xf]
  %v433 = vld [vmem:[%s4 + $0x24] sm:$0xf]
  %v434 = vld [vmem:[%s4 + $0x28] sm:$0xf]
  %v435 = vld [vmem:[%s4 + $0x2c] sm:$0xf]
  %v436 = vld [vmem:[%s4 + $0x30] sm:$0xf]
  %v437 = vld [vmem:[%s4 + $0x34] sm:$0xf]
  %v438 = vld [vmem:[%s4 + $0x38] sm:$0xf]
  %v439 = vld [vmem:[%s4 + $0x3c] sm:$0xf]
  %v440 = vld [vmem:[%s4 + $0x40] sm:$0xf]
  %v441 = vld [vmem:[%s4 + $0x44] sm:$0xf]
  %v442 = vld [vmem:[%s4 + $0x48] sm:$0xf]
  %v443 = vld [vmem:[%s4 + $0x4c] sm:$0xf]
  %v444 = vld [vmem:[%s4 + $0x50] sm:$0xf]
  %v445 = vld [vmem:[%s4 + $0x54] sm:$0xf]
  %v446 = vld [vmem:[%s4 + $0x58] sm:$0xf]
  %v447 = vld [vmem:[%s4 + $0x5c] sm:$0xf]
  %v448 = vld [vmem:[%s4 + $0x60] sm:$0xf]
  %v449 = vld [vmem:[%s4 + $0x64] sm:$0xf]
  %v450 = vld [vmem:[%s4 + $0x68] sm:$0xf]
  %v451 = vld [vmem:[%s4 + $0x6c] sm:$0xf]
  %v452 = vld [vmem:[%s4 + $0x70] sm:$0xf]
  %v453 = vld [vmem:[%s4 + $0x74] sm:$0xf]
  %v454 = vld [vmem:[%s4 + $0x78] sm:$0xf]
  %v455 = vld [vmem:[%s4 + $0x7c] sm:$0xf]
  %v456 = vld [vmem:[%s5] sm:$0x1]
  %v458 = vperm.slane %v456, 0
  %v492 = vunpack.c.l.b16 %v424
  %v493 = vunpack.c.l.b16 %v425
  %v494 = vunpack.c.l.b16 %v426
  %v495 = vunpack.c.l.b16 %v427
  %v496 = vunpack.c.l.b16 %v428
  %v497 = vunpack.c.l.b16 %v429
  %v498 = vunpack.c.l.b16 %v430
  %v499 = vunpack.c.l.b16 %v431
  %v500 = vunpack.c.l.b16 %v432
  %v501 = vunpack.c.l.b16 %v433
  %v502 = vunpack.c.l.b16 %v434
  %v503 = vunpack.c.l.b16 %v435
  %v504 = vunpack.c.l.b16 %v436
  %v505 = vunpack.c.l.b16 %v437
  %v506 = vunpack.c.l.b16 %v438
  %v507 = vunpack.c.l.b16 %v439
  %v508 = vunpack.c.l.b16 %v440
  %v509 = vunpack.c.l.b16 %v441
  %v510 = vunpack.c.l.b16 %v442
  %v511 = vunpack.c.l.b16 %v443
  %v512 = vunpack.c.l.b16 %v444
  %v513 = vunpack.c.l.b16 %v445
  %v514 = vunpack.c.l.b16 %v446
  %v515 = vunpack.c.l.b16 %v447
  %v516 = vunpack.c.l.b16 %v448
  %v517 = vunpack.c.l.b16 %v449
  %v518 = vunpack.c.l.b16 %v450
  %v519 = vunpack.c.l.b16 %v451
  %v520 = vunpack.c.l.b16 %v452
  %v521 = vunpack.c.l.b16 %v453
  %v522 = vunpack.c.l.b16 %v454
  %v523 = vunpack.c.l.b16 %v455
  %v524 = vpack.c.b16 %v493, %v492
  %v525 = vpack.c.b16 %v495, %v494
  %v526 = vpack.c.b16 %v497, %v496
  %v527 = vpack.c.b16 %v499, %v498
  %v528 = vpack.c.b16 %v501, %v500
  %v529 = vpack.c.b16 %v503, %v502
  %v530 = vpack.c.b16 %v505, %v504
  %v531 = vpack.c.b16 %v507, %v506
  %v532 = vpack.c.b16 %v509, %v508
  %v533 = vpack.c.b16 %v511, %v510
  %v534 = vpack.c.b16 %v513, %v512
  %v535 = vpack.c.b16 %v515, %v514
  %v536 = vpack.c.b16 %v517, %v516
  %v537 = vpack.c.b16 %v519, %v518
  %v538 = vpack.c.b16 %v521, %v520
  %v539 = vpack.c.b16 %v523, %v522
  %556 = vmatpush.bf16.msra.mxu0 %v531
  %557 = vmatpush.bf16.msra.mxu0 %v530
  %558 = vmatpush.bf16.msra.mxu0 %v529
  %559 = vmatpush.bf16.msra.mxu0 %v528
  %560 = vmatpush.bf16.msra.mxu0 %v527
  %561 = vmatpush.bf16.msra.mxu0 %v526
  %562 = vmatpush.bf16.msra.mxu0 %v525
  %563 = vmatpush.bf16.msra.mxu0 %v524
  %564 = vmatmul.bf16.gmra.mxu0 %v408
  %v565 = vpop.f32.mrf.mxu0
  %v566 = vadd.f32 %v458, %v565
  %v567 = vpop.f32.mrf.mxu0
  %v568 = vadd.f32 %v458, %v567
  %569 = vmatmul.bf16.gmra.mxu0 %v410
  %v570 = vpop.f32.mrf.mxu0
  %v571 = vadd.f32 %v458, %v570
  %v572 = vpop.f32.mrf.mxu0
  %v573 = vadd.f32 %v458, %v572
  %574 = vmatmul.bf16.gmra.mxu0 %v412
  %v575 = vpop.f32.mrf.mxu0
  %v576 = vadd.f32 %v458, %v575
  %v577 = vpop.f32.mrf.mxu0
  %v578 = vadd.f32 %v458, %v577
  %579 = vmatmul.bf16.gmra.mxu0 %v414
  %v580 = vpop.f32.mrf.mxu0
  %v581 = vadd.f32 %v458, %v580
  %v582 = vpop.f32.mrf.mxu0
  %v583 = vadd.f32 %v458, %v582
  %584 = vmatmul.bf16.gmra.mxu0 %v416
  %v585 = vpop.f32.mrf.mxu0
  %v586 = vadd.f32 %v458, %v585
  %v587 = vpop.f32.mrf.mxu0
  %v588 = vadd.f32 %v458, %v587
  %589 = vmatmul.bf16.gmra.mxu0 %v418
  %v590 = vpop.f32.mrf.mxu0
  %v591 = vadd.f32 %v458, %v590
  %v592 = vpop.f32.mrf.mxu0
  %v593 = vadd.f32 %v458, %v592
  %594 = vmatmul.bf16.gmra.mxu0 %v420
  %v595 = vpop.f32.mrf.mxu0
  %v596 = vadd.f32 %v458, %v595
  %v597 = vpop.f32.mrf.mxu0
  %v598 = vadd.f32 %v458, %v597
  %599 = vmatmul.bf16.gmra.mxu0 %v422
  %v600 = vpop.f32.mrf.mxu0
  %v601 = vadd.f32 %v458, %v600
  %v602 = vpop.f32.mrf.mxu0
  %v603 = vadd.f32 %v458, %v602
  %604 = vdwg.mxu0
  %605 = vmatpush.bf16.msra.mxu0 %v539
  %606 = vmatpush.bf16.msra.mxu0 %v538
  %607 = vmatpush.bf16.msra.mxu0 %v537
  %608 = vmatpush.bf16.msra.mxu0 %v536
  %609 = vmatpush.bf16.msra.mxu0 %v535
  %610 = vmatpush.bf16.msra.mxu0 %v534
  %611 = vmatpush.bf16.msra.mxu0 %v533
  %612 = vmatpush.bf16.msra.mxu0 %v532
  %613 = vmatmul.bf16.gmra.mxu0 %v409
  %v614 = vpop.f32.mrf.mxu0
  %v615 = vadd.f32 %v566, %v614
  %v616 = vpop.f32.mrf.mxu0
  %v617 = vadd.f32 %v568, %v616
  %618 = vmatmul.bf16.gmra.mxu0 %v411
  %v619 = vpop.f32.mrf.mxu0
  %v620 = vadd.f32 %v571, %v619
  %v621 = vpop.f32.mrf.mxu0
  %v622 = vadd.f32 %v573, %v621
  %623 = vmatmul.bf16.gmra.mxu0 %v413
  %v624 = vpop.f32.mrf.mxu0
  %v625 = vadd.f32 %v576, %v624
  %v626 = vpop.f32.mrf.mxu0
  %v627 = vadd.f32 %v578, %v626
  %628 = vmatmul.bf16.gmra.mxu0 %v415
  %v629 = vpop.f32.mrf.mxu0
  %v630 = vadd.f32 %v581, %v629
  %v631 = vpop.f32.mrf.mxu0
  %v632 = vadd.f32 %v583, %v631
  %633 = vmatmul.bf16.gmra.mxu0 %v417
  %v634 = vpop.f32.mrf.mxu0
  %v635 = vadd.f32 %v586, %v634
  %v636 = vpop.f32.mrf.mxu0
  %v637 = vadd.f32 %v588, %v636
  %638 = vmatmul.bf16.gmra.mxu0 %v419
  %v639 = vpop.f32.mrf.mxu0
  %v640 = vadd.f32 %v591, %v639
  %v641 = vpop.f32.mrf.mxu0
  %v642 = vadd.f32 %v593, %v641
  %643 = vmatmul.bf16.gmra.mxu0 %v421
  %v644 = vpop.f32.mrf.mxu0
  %v645 = vadd.f32 %v596, %v644
  %v646 = vpop.f32.mrf.mxu0
  %v647 = vadd.f32 %v598, %v646
  %648 = vmatmul.bf16.gmra.mxu0 %v423
  %v649 = vpop.f32.mrf.mxu0
  %v650 = vadd.f32 %v601, %v649
  %v651 = vpop.f32.mrf.mxu0
  %v652 = vadd.f32 %v603, %v651
  %653 = vdwg.mxu0
  %v654 = vmax.f32 %v615, 0.0
  %v655 = vmax.f32 %v617, 0.0
  %v656 = vmax.f32 %v620, 0.0
  %v657 = vmax.f32 %v622, 0.0
  %v658 = vmax.f32 %v625, 0.0
  %v659 = vmax.f32 %v627, 0.0
  %v660 = vmax.f32 %v630, 0.0
  %v661 = vmax.f32 %v632, 0.0
  %v662 = vmax.f32 %v635, 0.0
  %v663 = vmax.f32 %v637, 0.0
  %v664 = vmax.f32 %v640, 0.0
  %v665 = vmax.f32 %v642, 0.0
  %v666 = vmax.f32 %v645, 0.0
  %v667 = vmax.f32 %v647, 0.0
  %v668 = vmax.f32 %v650, 0.0
  %v669 = vmax.f32 %v652, 0.0
  %670 = vxpose.xlu0.b32.start [1/16] %v654, 128
  %671 = vxpose.xlu0.b32.cont [2/16] %v655, 128
  %672 = vxpose.xlu0.b32.cont [3/16] %v656, 128
  %673 = vxpose.xlu0.b32.cont [4/16] %v657, 128
  %674 = vxpose.xlu0.b32.cont [5/16] %v658, 128
  %675 = vxpose.xlu0.b32.cont [6/16] %v659, 128
  %676 = vxpose.xlu0.b32.cont [7/16] %v660, 128
  %677 = vxpose.xlu0.b32.cont [8/16] %v661, 128
  %678 = vxpose.xlu0.b32.cont [9/16] %v662, 128
  %679 = vxpose.xlu0.b32.cont [10/16] %v663, 128
  %680 = vxpose.xlu0.b32.cont [11/16] %v664, 128
  %681 = vxpose.xlu0.b32.cont [12/16] %v665, 128
  %682 = vxpose.xlu0.b32.cont [13/16] %v666, 128
  %683 = vxpose.xlu0.b32.cont [14/16] %v667, 128
  %684 = vxpose.xlu0.b32.cont [15/16] %v668, 128
  %685 = vxpose.xlu0.b32.end [16/16] %v669, 128
  %v686 = vpop.trf.xlu0
  %v687 = vpop.trf.xlu0
  %v688 = vpop.trf.xlu0
  %v689 = vpop.trf.xlu0
  %v690 = vpop.trf.xlu0
  %v691 = vpop.trf.xlu0
  %v692 = vpop.trf.xlu0
  %v693 = vpop.trf.xlu0
  %v694 = vpop.trf.xlu0
  %v695 = vpop.trf.xlu0
  %v696 = vpop.trf.xlu0
  %v697 = vpop.trf.xlu0
  %v698 = vpop.trf.xlu0
  %v699 = vpop.trf.xlu0
  %v700 = vpop.trf.xlu0
  %v701 = vpop.trf.xlu0
  %v702 = vpack.c.bf16 %v687, %v686
  %v703 = vpack.c.bf16 %v689, %v688
  %v704 = vpack.c.bf16 %v691, %v690
  %v705 = vpack.c.bf16 %v693, %v692
  %v706 = vpack.c.bf16 %v695, %v694
  %v707 = vpack.c.bf16 %v697, %v696
  %v708 = vpack.c.bf16 %v699, %v698
  %v709 = vpack.c.bf16 %v701, %v700
  %v710 = vld [vmem:[%s6] sm:$0xf]
  %711 = vmatpush.bf16.msra.mxu0 %v709
  %712 = vmatpush.bf16.msra.mxu0 %v708
  %713 = vmatpush.bf16.msra.mxu0 %v707
  %714 = vmatpush.bf16.msra.mxu0 %v706
  %715 = vmatpush.bf16.msra.mxu0 %v705
  %716 = vmatpush.bf16.msra.mxu0 %v704
  %717 = vmatpush.bf16.msra.mxu0 %v703
  %718 = vmatpush.bf16.msra.mxu0 %v702
  %719 = vmatmul.bf16.gmra.mxu0 %v710
  %v720 = vpop.f32.mrf.mxu0
  %v721 = vadd.f32 0.0, %v720
  %v722 = vpop.f32.mrf.mxu0
  %723 = vdwg.mxu0
  %v724 = vld [vmem:[#allocation3] sm:$0x1]
  %726 = vset.pattern.permute.xlu0 0
  %727 = vperm.xlu0 %726, %v724
  %v728 = vpop.permute.xlu0 %727
  %v730 = vperm.slane %v728, 0
  %v731 = vadd.f32 %v721, %v730
  %v732 = vxor.u32 %v731, 2147483648
  %v733 = vmul.f32 %v732, 1.442695
  %v734 = vpow.pop %v733
  %v735 = vadd.f32 %v734, 1.0
  %v736 = vrcp.pop %v735
  %v737 = vmul.f32 %v735, %v736
  %v738 = vsub.f32 1.0, %v737
  %v739 = vmul.f32 %v736, %v738
  %v740 = vadd.f32 %v736, %v739
  %vm741 = vweird.f32 %v735
  %vm742 = vweird.f32 %v736
  %vm743 = vmor %vm741, %vm742
  %v744 = vsel %vm743, %v736, %v740
  %v745 = vand.u32 2147483647, %v735
  %vm746 = vcmp.eq.f32.partialorder %v745, 8.507059e+37
  %v747 = vand.u32 %v735, 2147483648
  %v748 = vor.u32 1.1754944e-38, %v747
  %v749 = vsel %vm746, %v748, %v744
  %v750 = vmul.f32 1.0, %v749
  %751 = vst [vmem:[%s8] sm:$0x1] %v750
  // Predicated region
  $region34: #{baseline_model_forward.1} parent=0 // pred_check
    _
  $region35: #{baseline_model_forward.1} parent=0 // pred_check_branch
    %753 = sbr.rel (0) target = $region37
  $region36: #{baseline_model_forward.1} parent=0 // pred_region
    _
  $region37: #{baseline_model_forward.1} parent=0 // pred_fallthru
    _
  // Predicated region
  $region38: #{baseline_model_forward.1} parent=0 // pred_check
    _
  $region39: #{baseline_model_forward.1} parent=0 // pred_check_branch
    %755 = sbr.rel (0) target = $region41
  $region40: #{baseline_model_forward.1} parent=0 // pred_region
    _
  $region41: #{baseline_model_forward.1} parent=0 // pred_fallthru
    _

</llo_original>
